<compile_context>
chip_gen: v6e
topology: v6e:2x2x1
jax: 0.10.0
libtpu: 0.0.40
codegen_flags: <defaults>
</compile_context>

<pallas_src>
import jax
import jax.numpy as jnp
import numpy as np
from jax.experimental import pallas as pl
from jax.experimental.pallas import tpu as pltpu


def attention_kernel(feat_ref, att2_ref, w_enc_ref, w_full_ref,
                     awe_ref, alpha_ref):
    """One grid step handles TB batch elements.

    feat_ref  : (TB, P, F)   features (f32 or bf16 MXU operand)
    att2_ref  : (TB, 1, A)   precomputed decoder_att + (b_enc + b_dec), f32
    w_enc_ref : (F, A)       encoder_att weight (f32 or bf16)
    w_full_ref: (1, A)       full_att weight as a row, f32
    awe_ref   : (TB, 1, F)   out: attention-weighted encoding (lane-dense F)
    alpha_ref : (TB, 1, P)   out: attention weights (lane-dense P)
    """
    tb, num_pix, feat_sz = feat_ref.shape
    attn_dim = w_enc_ref.shape[1]

    feats = feat_ref[...]                                       # (TB, P, F)

    # encoder_att as a single (TB*P, F) @ (F, A) MXU matmul, f32 accumulate.
    att1 = jnp.dot(
        feats.reshape(tb * num_pix, feat_sz), w_enc_ref[...],
        preferred_element_type=jnp.float32,
    ).reshape(tb, num_pix, attn_dim)                            # (TB, P, A)

    # + decoder_att (precomputed, biases folded in), broadcast over pixels; relu.
    e = jnp.maximum(att1 + att2_ref[...], 0.0)                  # (TB, P, A) f32

    # full_att: contract the lane axis A -> lane-dense scores (TB, P).
    # (b_full omitted: constant pre-softmax shift, no effect on alpha/awe.)
    att = jnp.sum(e * w_full_ref[...], axis=-1)                 # (TB, P) f32

    # Row softmax over pixels (lane-axis reductions); reciprocal on the EUP.
    # NOTE: block covers the full pixel axis P, so no padded-row masking needed.
    m = jnp.max(att, axis=-1, keepdims=True)                    # (TB, 1)
    p = jnp.exp(att - m)                                        # (TB, P)
    s = jnp.sum(p, axis=-1, keepdims=True)                      # (TB, 1)
    alpha = p * pl.reciprocal(s, approx=True)                   # (TB, P) f32

    # Attention-weighted encoding on the MXU: batched (1,P) @ (P,F).
    awe = jnp.einsum(
        "bqp,bpf->bqf",
        alpha[:, None, :].astype(feats.dtype), feats,
        preferred_element_type=jnp.float32,
    )                                                           # (TB, 1, F) f32

    awe_ref[...] = awe
    alpha_ref[...] = alpha[:, None, :]


def _pick_block_b(batch, max_block=8):
    """Largest divisor of `batch` <= max_block, preferring >= 2 grid steps
    so both TensorCores get work on v7x."""
    divisors = [d for d in range(1, min(batch, max_block) + 1) if batch % d == 0]
    for d in reversed(divisors):
        if batch // d >= 2:
            return d
    return divisors[-1]


def attention_forward(features, hidden, params, *,
                      mxu_dtype=jnp.float32, max_block_b=8):
    B, P, F = features.shape
    A = params["w_enc"].shape[1]

    tb = _pick_block_b(B, max_block_b)
    grid_b = B // tb

    # Hoist decoder_att out of the per-step path and fold both linear biases
    # into it (b_full is dropped entirely: softmax is shift-invariant).
    att2 = hidden @ params["w_dec"] + (params["b_dec"] + params["b_enc"])
    att2 = att2.astype(jnp.float32).reshape(B, 1, A)

    feats_in = features.astype(mxu_dtype)
    w_enc = params["w_enc"].astype(mxu_dtype)
    w_full_row = params["w_full"].reshape(1, A).astype(jnp.float32)

    awe, alpha = pl.pallas_call(
        attention_kernel,
        out_shape=(
            jax.ShapeDtypeStruct((B, 1, F), jnp.float32),
            jax.ShapeDtypeStruct((B, 1, P), jnp.float32),
        ),
        grid_spec=pltpu.PrefetchScalarGridSpec(
            num_scalar_prefetch=0,
            grid=(grid_b,),
            in_specs=[
                pl.BlockSpec((tb, P, F), lambda b: (b, 0, 0)),   # features
                pl.BlockSpec((tb, 1, A), lambda b: (b, 0, 0)),   # decoder_att+bias
                pl.BlockSpec((F, A), lambda b: (0, 0)),          # w_enc (grid-invariant)
                pl.BlockSpec((1, A), lambda b: (0, 0)),          # w_full row
            ],
            out_specs=[
                pl.BlockSpec((tb, 1, F), lambda b: (b, 0, 0)),   # awe  (lane-dense F)
                pl.BlockSpec((tb, 1, P), lambda b: (b, 0, 0)),   # alpha (lane-dense P)
            ],
        ),
        compiler_params=pltpu.CompilerParams(
            dimension_semantics=("parallel",),   # batch axis -> megacore on v7x
            # Explicit scoped-VMEM budget: above v5e's 16 MiB default, safely
            # under v7x's 64 MiB physical VMEM.
            vmem_limit_bytes=48 * 1024 * 1024,
        ),
    )(feats_in, att2, w_enc, w_full_row)

    return awe.reshape(B, F), alpha.reshape(B, P)


def reference_forward(features, hidden, params):
    """Pure-JAX reference mirroring the PyTorch module (keeps b_full)."""
    att1 = features @ params["w_enc"] + params["b_enc"][0]
    att2 = hidden @ params["w_dec"] + params["b_dec"][0]
    e = jnp.maximum(att1 + att2[:, None, :], 0.0)
    att = (e @ params["w_full"])[..., 0] + params["b_full"][0, 0]
    alpha = jax.nn.softmax(att, axis=1)
    awe = (features * alpha[:, :, None]).sum(axis=1)
    return awe, alpha


def init_params(key, feature_size, hidden_size, attention_dim):
    """Deterministic synthetic init (uniform like torch.nn.Linear default)."""
    ks = jax.random.split(key, 6)

    def lin(kw, kb, fan_in, fan_out):
        bound = 1.0 / np.sqrt(fan_in)
        w = jax.random.uniform(kw, (fan_in, fan_out), jnp.float32, -bound, bound)
        b = jax.random.uniform(kb, (1, fan_out), jnp.float32, -bound, bound)
        return w, b

    w_enc, b_enc = lin(ks[0], ks[1], feature_size, attention_dim)
    w_dec, b_dec = lin(ks[2], ks[3], hidden_size, attention_dim)
    w_full, b_full = lin(ks[4], ks[5], attention_dim, 1)
    return {
        "w_enc": w_enc, "b_enc": b_enc,
        "w_dec": w_dec, "b_dec": b_dec,
        "w_full": w_full, "b_full": b_full.reshape(1, 1),
    }


if __name__ == "__main__":
    B, P = 8, 16                # batch, num_pixels (P=16 keeps bf16 sublane tiles aligned)
    FEATURE_SIZE = 32
    HIDDEN_SIZE = 16
    ATTENTION_DIM = 32

    key = jax.random.PRNGKey(0)
    k_feat, k_hid, k_par = jax.random.split(key, 3)

    features = jax.random.normal(k_feat, (B, P, FEATURE_SIZE), jnp.float32)
    hidden = jax.random.normal(k_hid, (B, HIDDEN_SIZE), jnp.float32)
    params = init_params(k_par, FEATURE_SIZE, HIDDEN_SIZE, ATTENTION_DIM)

    awe_ref_v, alpha_ref_v = reference_forward(features, hidden, params)

    # f32 MXU path (tight check; tolerance bounded by the approx reciprocal).
    awe, alpha = attention_forward(features, hidden, params, mxu_dtype=jnp.float32)
    jax.block_until_ready((awe, alpha))
    np.testing.assert_allclose(np.asarray(awe), np.asarray(awe_ref_v),
                               rtol=5e-3, atol=5e-5)
    np.testing.assert_allclose(np.asarray(alpha), np.asarray(alpha_ref_v),
                               rtol=5e-3, atol=5e-5)

    # bf16 MXU-operand path (halves HBM feature traffic, 2x MXU rate on
    # v6e/v7x); relaxed tolerance vs the f32 reference.
    awe_bf, alpha_bf = attention_forward(features, hidden, params,
                                         mxu_dtype=jnp.bfloat16)
    jax.block_until_ready((awe_bf, alpha_bf))
    np.testing.assert_allclose(np.asarray(awe_bf), np.asarray(awe_ref_v),
                               rtol=3e-2, atol=5e-3)
    np.testing.assert_allclose(np.asarray(alpha_bf), np.asarray(alpha_ref_v),
                               rtol=3e-2, atol=5e-3)

    print("KERNEL_OK")
</pallas_src>

<mosaic_0001>
module attributes {stable_mosaic.version = 11 : i64} {
  func.func @attention_kernel(%arg0: i32, %arg1: memref<4x16x32xf32, #tpu.memory_space<vmem>>, %arg2: memref<4x1x32xf32, #tpu.memory_space<vmem>>, %arg3: memref<32x32xf32, #tpu.memory_space<vmem>>, %arg4: memref<1x32xf32, #tpu.memory_space<vmem>>, %arg5: memref<4x1x32xf32, #tpu.memory_space<vmem>>, %arg6: memref<4x1x16xf32, #tpu.memory_space<vmem>>) attributes {dimension_semantics = [#tpu.dimension_semantics<parallel>], iteration_bounds = array<i64: 2>, scalar_prefetch = 0 : i64, scratch_operands = 0 : i64, tpu.core_type = #tpu.core_type<tc>, window_params = [{transform_indices = @transform_0, window_bounds = array<i64: 4, 16, 32>}, {transform_indices = @transform_1, window_bounds = array<i64: 4, 1, 32>}, {pipeline_mode = #tpu.pipeline_mode<synchronous>, transform_indices = @transform_2, window_bounds = array<i64: 32, 32>}, {pipeline_mode = #tpu.pipeline_mode<synchronous>, transform_indices = @transform_3, window_bounds = array<i64: 1, 32>}, {transform_indices = @transform_4, window_bounds = array<i64: 4, 1, 32>}, {transform_indices = @transform_5, window_bounds = array<i64: 4, 1, 16>}]} {
    %c0 = arith.constant 0 : index
    %c0_0 = arith.constant 0 : index
    %c0_1 = arith.constant 0 : index
    %0 = vector.load %arg1[%c0, %c0_0, %c0_1] : memref<4x16x32xf32, #tpu.memory_space<vmem>>, vector<4x16x32xf32>
    %1 = vector.shape_cast %0 : vector<4x16x32xf32> to vector<64x32xf32>
    %c0_2 = arith.constant 0 : index
    %c0_3 = arith.constant 0 : index
    %2 = vector.load %arg3[%c0_2, %c0_3] : memref<32x32xf32, #tpu.memory_space<vmem>>, vector<32x32xf32>
    %cst = arith.constant dense<0.000000e+00> : vector<64x32xf32>
    %3 = tpu.matmul %1, %2, %cst {dimension_numbers = #tpu.dot_dimension_numbers<[1], [0], [0], [1], [0, 0, 1, 1], [], []>} : vector<64x32xf32>, vector<32x32xf32>, vector<64x32xf32> -> vector<64x32xf32>
    %4 = vector.shape_cast %3 : vector<64x32xf32> to vector<4x16x32xf32>
    %c0_4 = arith.constant 0 : index
    %c0_5 = arith.constant 0 : index
    %c0_6 = arith.constant 0 : index
    %5 = vector.load %arg2[%c0_4, %c0_5, %c0_6] : memref<4x1x32xf32, #tpu.memory_space<vmem>>, vector<4x1x32xf32>
    %6 = vector.broadcast %5 : vector<4x1x32xf32> to vector<4x16x32xf32>
    %7 = arith.addf %4, %6 : vector<4x16x32xf32>
    %cst_7 = arith.constant 0.000000e+00 : f32
    %8 = vector.broadcast %cst_7 : f32 to vector<4x16x32xf32>
    %9 = arith.maximumf %7, %8 : vector<4x16x32xf32>
    %c0_8 = arith.constant 0 : index
    %c0_9 = arith.constant 0 : index
    %10 = vector.load %arg4[%c0_8, %c0_9] : memref<1x32xf32, #tpu.memory_space<vmem>>, vector<1x32xf32>
    %11 = vector.shape_cast %10 : vector<1x32xf32> to vector<1x1x32xf32>
    %12 = vector.broadcast %11 : vector<1x1x32xf32> to vector<4x16x32xf32>
    %13 = arith.mulf %9, %12 : vector<4x16x32xf32>
    %cst_10 = arith.constant dense<0.000000e+00> : vector<4x16xf32>
    %14 = vector.multi_reduction <add>, %13, %cst_10 [2] : vector<4x16x32xf32> to vector<4x16xf32>
    %cst_11 = arith.constant dense<0xFF800000> : vector<4xf32>
    %15 = vector.multi_reduction <maximumf>, %14, %cst_11 [1] : vector<4x16xf32> to vector<4xf32>
    %16 = vector.shape_cast %15 : vector<4xf32> to vector<4x1xf32>
    %17 = vector.broadcast %16 : vector<4x1xf32> to vector<4x16xf32>
    %18 = arith.subf %14, %17 : vector<4x16xf32>
    %19 = math.exp %18 : vector<4x16xf32>
    %cst_12 = arith.constant dense<0.000000e+00> : vector<4xf32>
    %20 = vector.multi_reduction <add>, %19, %cst_12 [1] : vector<4x16xf32> to vector<4xf32>
    %21 = vector.shape_cast %20 : vector<4xf32> to vector<4x1xf32>
    %22 = tpu.reciprocal %21 {approx = true} : vector<4x1xf32> -> vector<4x1xf32>
    %23 = vector.broadcast %22 : vector<4x1xf32> to vector<4x16xf32>
    %24 = arith.mulf %19, %23 : vector<4x16xf32>
    %25 = vector.shape_cast %24 : vector<4x16xf32> to vector<4x1x16xf32>
    "tpu.trace_start"() <{level = 10 : i32, message = "bqp,bpf->bqf"}> : () -> ()
    %cst_13 = arith.constant dense<0.000000e+00> : vector<4x1x32xf32>
    %26 = tpu.matmul %25, %0, %cst_13 {dimension_numbers = #tpu.dot_dimension_numbers<[2], [1], [1], [2], [0, 0, 0, 1, 1, 2], [0], [0]>} : vector<4x1x16xf32>, vector<4x16x32xf32>, vector<4x1x32xf32> -> vector<4x1x32xf32>
    "tpu.trace_stop"() : () -> ()
    %c0_14 = arith.constant 0 : index
    %c0_15 = arith.constant 0 : index
    %c0_16 = arith.constant 0 : index
    %27 = vector.load %arg5[%c0_14, %c0_15, %c0_16] : memref<4x1x32xf32, #tpu.memory_space<vmem>>, vector<4x1x32xf32>
    tpu.vector_store %arg5[%c0_14, %c0_15, %c0_16], %26 {strides = array<i32>} : memref<4x1x32xf32, #tpu.memory_space<vmem>>, vector<4x1x32xf32>,
    %28 = vector.shape_cast %24 : vector<4x16xf32> to vector<4x1x16xf32>
    %c0_17 = arith.constant 0 : index
    %c0_18 = arith.constant 0 : index
    %c0_19 = arith.constant 0 : index
    %29 = vector.load %arg6[%c0_17, %c0_18, %c0_19] : memref<4x1x16xf32, #tpu.memory_space<vmem>>, vector<4x1x16xf32>
    tpu.vector_store %arg6[%c0_17, %c0_18, %c0_19], %28 {strides = array<i32>} : memref<4x1x16xf32, #tpu.memory_space<vmem>>, vector<4x1x16xf32>,
    return
  }
  func.func @transform_0(%arg0: i32) -> (i32, i32, i32) {
    %c0_i32 = arith.constant 0 : i32
    %c0_i32_0 = arith.constant 0 : i32
    %c0_i32_1 = arith.constant 0 : i32
    return %arg0, %c0_i32, %c0_i32_0 : i32, i32, i32
  }
  func.func @transform_1(%arg0: i32) -> (i32, i32, i32) {
    %c0_i32 = arith.constant 0 : i32
    %c0_i32_0 = arith.constant 0 : i32
    %c0_i32_1 = arith.constant 0 : i32
    return %arg0, %c0_i32, %c0_i32_0 : i32, i32, i32
  }
  func.func @transform_2(%arg0: i32) -> (i32, i32) {
    %c0_i32 = arith.constant 0 : i32
    %c0_i32_0 = arith.constant 0 : i32
    %c0_i32_1 = arith.constant 0 : i32
    return %c0_i32, %c0_i32_0 : i32, i32
  }
  func.func @transform_3(%arg0: i32) -> (i32, i32) {
    %c0_i32 = arith.constant 0 : i32
    %c0_i32_0 = arith.constant 0 : i32
    %c0_i32_1 = arith.constant 0 : i32
    return %c0_i32, %c0_i32_0 : i32, i32
  }
  func.func @transform_4(%arg0: i32) -> (i32, i32, i32) {
    %c0_i32 = arith.constant 0 : i32
    %c0_i32_0 = arith.constant 0 : i32
    %c0_i32_1 = arith.constant 0 : i32
    return %arg0, %c0_i32, %c0_i32_0 : i32, i32, i32
  }
  func.func @transform_5(%arg0: i32) -> (i32, i32, i32) {
    %c0_i32 = arith.constant 0 : i32
    %c0_i32_0 = arith.constant 0 : i32
    %c0_i32_1 = arith.constant 0 : i32
    return %arg0, %c0_i32, %c0_i32_0 : i32, i32, i32
  }
}

</mosaic_0001>

<llo_original>
// kernel: tpu_custom_call.1
$region0: #{tpu_custom_call.1}
  #allocation0 [shape = 'u32[]', space=smem, size = 0x4, offset = 0x4, fixed_abs, tag = 'smem constant byte address 0x4 - core index']
  #allocation1 [shape = 'u32[144,128]{1,0:T(1,128)}', space=vmem, size = 0x12000, scoped, tag = 'internal scratch']
  %s0 = inlined_call_operand.hbm [shape: f32[8,16,32], index: 0, kind: input, shape index: {}]
  %s1 = inlined_call_operand.hbm [shape: f32[8,1,32], index: 1, kind: input, shape index: {}]
  %s2 = inlined_call_operand.hbm [shape: f32[32,32], index: 2, kind: input, shape index: {}]
  %s3 = inlined_call_operand.vmem [shape: f32[1,32], index: 3, kind: input, shape index: {}]
  %s4 = inlined_call_operand.hbm [shape: f32[8,1,32], index: 4, kind: output, shape index: {0}]
  %s5 = inlined_call_operand.hbm [shape: f32[8,1,16], index: 5, kind: output, shape index: {1}]
  %6 = xla_tuple %s4, %s5
  %s7 = sld [smem:[#allocation0]]
  $region69: #{tpu_custom_call.1} parent=0
    _
  %s9 = ssub.s32 1, %s7
  %s10 = scalar_select 0, %s9, %s7
  $region1: #{tpu_custom_call.1} parent=0
    #allocation2 [shape = 'u8[65536]{0}', space=vmem, size = 0x10000, scoped, tag = 'input window, operand 0']
    #allocation3 [shape = 's32[2]{0}', space=sflag, size = 0x8, scoped, tag = 'scoped memory for tpu_custom_call.1']
    #allocation4 [shape = 's32[2]{0}', space=sflag, size = 0x8, scoped, tag = 'scoped memory for tpu_custom_call.1']
    #allocation5 [shape = 'u8[4096]{0}', space=vmem, size = 0x1000, scoped, tag = 'input window, operand 1']
    #allocation6 [shape = 's32[2]{0}', space=sflag, size = 0x8, scoped, tag = 'scoped memory for tpu_custom_call.1']
    #allocation7 [shape = 'u8[16384]{0}', space=vmem, size = 0x4000, scoped, tag = 'input window, operand 2, single buffered']
    #allocation8 [shape = 'u8[4096]{0}', space=vmem, size = 0x1000, scoped, tag = 'output window, operand 0']
    #allocation9 [shape = 'u8[4096]{0}', space=vmem, size = 0x1000, scoped, tag = 'output window, operand 1']
    #allocation10 [shape = 's32[2]{0}', space=sflag, size = 0x8, scoped, tag = 'scoped memory for tpu_custom_call.1']
    %11 = vsyncpa [#allocation3], 0
    %s12 = scalar_lea.sflag [#allocation3], 1
    %13 = vsyncpa %s12, 0
    %14 = vsyncpa [#allocation6], 0
    %s15 = scalar_lea.sflag [#allocation6], 1
    %16 = vsyncpa %s15, 0
    %17 = vsyncpa [#allocation4], 0
    %s18 = scalar_lea.sflag [#allocation4], 1
    %19 = vsyncpa %s18, 0
    %20 = vsyncpa [#allocation10], 0
    %s21 = scalar_lea.sflag [#allocation10], 1
    %22 = vsyncpa %s21, 0
    loop: start=0, step=1, limit=4
    $region2: #{tpu_custom_call.1} parent=1 // loop_pre_header
      _
    $region3: #{tpu_custom_call.1} parent=1 // loop_header
      %s24 = sphi 0, %s28
      %p25 = scmp.ge.s32.totalorder %s24, 4
      %s34 = sphi 0, %s36
      %s37 = sphi 0, %s34
      %s38 = sphi 0, %s37
      %s54 = sphi 0, %s38
      %s60 = sphi 0, %s62
      %s63 = sphi 0, %s60
      %s64 = sphi 0, %s63
      %s80 = sphi 0, %s64
      %s84 = sphi 0, %s84
      %s86 = sphi 0, %s84
      %s87 = sphi 0, %s86
      %s101 = sphi 0, %s87
      %s105 = sphi 0, %s105
      %s107 = sphi 0, %s105
      %s108 = sphi 0, %s107
      %s122 = sphi 0, %s108
      %s128 = sphi 0, %s130
      %s131 = sphi 0, %s128
      %s132 = sphi 0, %s131
      %s148 = sphi 0, %s132
      %s154 = sphi 0, %s156
      %s157 = sphi 0, %s154
      %s158 = sphi 0, %s157
      %s174 = sphi 0, %s158
    $region4: #{tpu_custom_call.1} parent=1 // loop_header_branch
      %27 = sbr.rel (%p25) target = $region8
    $region5: #{tpu_custom_call.1} parent=1 // loop_body
      %s29 = ssub.s32 %s24, 1
      %s30 = ssub.s32 %s24, 2
      %s31 = sadd.s32 %s24, 1
      %s32 = ssub.s32 %s24, %s31
      %p33 = scmp.eq.s32.totalorder %s32, 0
      %s35 = sadd.s32 %s34, 1
      %s36 = scalar_select %p33, %s34, %s35
      %p39 = pneg %p33
      %p40 = scmp.eq.s32.totalorder %s24, 1
      %p41 = por %p39, %p40
      %p42 = scmp.ne.s32.totalorder %s34, %s37
      %p43 = scmp.eq.s32.totalorder %s24, 0
      %p44 = por %p42, %p43
      %p45 = scmp.ne.s32.totalorder %s34, %s37
      %p46 = scmp.eq.s32.totalorder %s29, 1
      %p47 = por %p45, %p46
      %p48 = scmp.ne.s32.totalorder %s37, %s38
      %p49 = scmp.eq.s32.totalorder %s29, 0
      %p50 = por %p48, %p49
      %p51 = scmp.ne.s32.totalorder %s37, %s38
      %p52 = scmp.eq.s32.totalorder %s30, 1
      %p53 = por %p51, %p52
      %p55 = scmp.ne.s32.totalorder %s38, %s54
      %p56 = scmp.eq.s32.totalorder %s30, 0
      %p57 = por %p55, %p56
      %s58 = ssub.s32 %s24, %s31
      %p59 = scmp.eq.s32.totalorder %s58, 0
      %s61 = sadd.s32 %s60, 1
      %s62 = scalar_select %p59, %s60, %s61
      %p65 = pneg %p59
      %p66 = scmp.eq.s32.totalorder %s24, 1
      %p67 = por %p65, %p66
      %p68 = scmp.ne.s32.totalorder %s60, %s63
      %p69 = scmp.eq.s32.totalorder %s24, 0
      %p70 = por %p68, %p69
      %p71 = scmp.ne.s32.totalorder %s60, %s63
      %p72 = scmp.eq.s32.totalorder %s29, 1
      %p73 = por %p71, %p72
      %p74 = scmp.ne.s32.totalorder %s63, %s64
      %p75 = scmp.eq.s32.totalorder %s29, 0
      %p76 = por %p74, %p75
      %p77 = scmp.ne.s32.totalorder %s63, %s64
      %p78 = scmp.eq.s32.totalorder %s30, 1
      %p79 = por %p77, %p78
      %p81 = scmp.ne.s32.totalorder %s64, %s80
      %p82 = scmp.eq.s32.totalorder %s30, 0
      %p83 = por %p81, %p82
      %s85 = sadd.s32 %s84, 1
      %p88 = scmp.eq.s32.totalorder %s24, 1
      %p89 = scmp.ne.s32.totalorder %s84, %s86
      %p90 = scmp.eq.s32.totalorder %s24, 0
      %p91 = por %p89, %p90
      %p92 = scmp.ne.s32.totalorder %s84, %s86
      %p93 = scmp.eq.s32.totalorder %s29, 1
      %p94 = por %p92, %p93
      %p95 = scmp.ne.s32.totalorder %s86, %s87
      %p96 = scmp.eq.s32.totalorder %s29, 0
      %p97 = por %p95, %p96
      %p98 = scmp.ne.s32.totalorder %s86, %s87
      %p99 = scmp.eq.s32.totalorder %s30, 1
      %p100 = por %p98, %p99
      %p102 = scmp.ne.s32.totalorder %s87, %s101
      %p103 = scmp.eq.s32.totalorder %s30, 0
      %p104 = por %p102, %p103
      %s106 = sadd.s32 %s105, 1
      %p109 = scmp.eq.s32.totalorder %s24, 1
      %p110 = scmp.ne.s32.totalorder %s105, %s107
      %p111 = scmp.eq.s32.totalorder %s24, 0
      %p112 = por %p110, %p111
      %p113 = scmp.ne.s32.totalorder %s105, %s107
      %p114 = scmp.eq.s32.totalorder %s29, 1
      %p115 = por %p113, %p114
      %p116 = scmp.ne.s32.totalorder %s107, %s108
      %p117 = scmp.eq.s32.totalorder %s29, 0
      %p118 = por %p116, %p117
      %p119 = scmp.ne.s32.totalorder %s107, %s108
      %p120 = scmp.eq.s32.totalorder %s30, 1
      %p121 = por %p119, %p120
      %p123 = scmp.ne.s32.totalorder %s108, %s122
      %p124 = scmp.eq.s32.totalorder %s30, 0
      %p125 = por %p123, %p124
      %s126 = ssub.s32 %s24, %s31
      %p127 = scmp.eq.s32.totalorder %s126, 0
      %s129 = sadd.s32 %s128, 1
      %s130 = scalar_select %p127, %s128, %s129
      %p133 = pneg %p127
      %p134 = scmp.eq.s32.totalorder %s24, 1
      %p135 = por %p133, %p134
      %p136 = scmp.ne.s32.totalorder %s128, %s131
      %p137 = scmp.eq.s32.totalorder %s24, 0
      %p138 = por %p136, %p137
      %p139 = scmp.ne.s32.totalorder %s128, %s131
      %p140 = scmp.eq.s32.totalorder %s29, 1
      %p141 = por %p139, %p140
      %p142 = scmp.ne.s32.totalorder %s131, %s132
      %p143 = scmp.eq.s32.totalorder %s29, 0
      %p144 = por %p142, %p143
      %p145 = scmp.ne.s32.totalorder %s131, %s132
      %p146 = scmp.eq.s32.totalorder %s30, 1
      %p147 = por %p145, %p146
      %p149 = scmp.ne.s32.totalorder %s132, %s148
      %p150 = scmp.eq.s32.totalorder %s30, 0
      %p151 = por %p149, %p150
      %s152 = ssub.s32 %s24, %s31
      %p153 = scmp.eq.s32.totalorder %s152, 0
      %s155 = sadd.s32 %s154, 1
      %s156 = scalar_select %p153, %s154, %s155
      %p159 = pneg %p153
      %p160 = scmp.eq.s32.totalorder %s24, 1
      %p161 = por %p159, %p160
      %p162 = scmp.ne.s32.totalorder %s154, %s157
      %p163 = scmp.eq.s32.totalorder %s24, 0
      %p164 = por %p162, %p163
      %p165 = scmp.ne.s32.totalorder %s154, %s157
      %p166 = scmp.eq.s32.totalorder %s29, 1
      %p167 = por %p165, %p166
      %p168 = scmp.ne.s32.totalorder %s157, %s158
      %p169 = scmp.eq.s32.totalorder %s29, 0
      %p170 = por %p168, %p169
      %p171 = scmp.ne.s32.totalorder %s157, %s158
      %p172 = scmp.eq.s32.totalorder %s30, 1
      %p173 = por %p171, %p172
      %p175 = scmp.ne.s32.totalorder %s158, %s174
      %p176 = scmp.eq.s32.totalorder %s30, 0
      %p177 = por %p175, %p176
      %p178 = scmp.le.s32.totalorder 1, %s24
      %p179 = scmp.lt.s32.totalorder %s24, 3
      %p180 = pnand %p178, %p179
      %p181 = pneg %p180
      // Predicated region
      $region9: #{tpu_custom_call.1} parent=5 // pred_check
        _
      $region10: #{tpu_custom_call.1} parent=5 // pred_check_branch
        %183 = sbr.rel (%p180) target = $region12
      $region11: #{tpu_custom_call.1} parent=5 // pred_region
        %s184 = ssub.s32 %s24, 1
        // Predicated region
        $region13: #{tpu_custom_call.1} parent=11 // pred_check
          %p185 = pneg %p97
        $region14: #{tpu_custom_call.1} parent=11 // pred_check_branch
          %187 = sbr.rel (%p185) target = $region16
        $region15: #{tpu_custom_call.1} parent=11 // pred_region
          %s189 = ssub.s32 512, 512
          %190 = vsyncadd [#allocation6], %s189
          %s191 = sshll.u32 [#allocation7], 4
          %s192 = int_to_ptr.vmem [resolvable:$true] %s191
          %197 = dma.hbm_to_vmem [thread:$0]  %s2, 512, %s192, [#allocation6], 128, 128, 8
        $region16: #{tpu_custom_call.1} parent=11 // pred_fallthru
          _
        // Predicated region
        $region17: #{tpu_custom_call.1} parent=11 // pred_check
          %p198 = pneg %p118
        $region18: #{tpu_custom_call.1} parent=11 // pred_check_branch
          %200 = sbr.rel (%p198) target = $region20
        $region19: #{tpu_custom_call.1} parent=11 // pred_region
          _
        $region20: #{tpu_custom_call.1} parent=11 // pred_fallthru
          _
      $region12: #{tpu_custom_call.1} parent=5 // pred_fallthru
        _
      %p201 = scmp.lt.s32.totalorder %s24, 2
      // Predicated region
      $region21: #{tpu_custom_call.1} parent=5 // pred_check
        %p202 = pneg %p201
      $region22: #{tpu_custom_call.1} parent=5 // pred_check_branch
        %204 = sbr.rel (%p202) target = $region24
      $region23: #{tpu_custom_call.1} parent=5 // pred_region
        // Predicated region
        $region25: #{tpu_custom_call.1} parent=23 // pred_check
          %p205 = pneg %p44
        $region26: #{tpu_custom_call.1} parent=23 // pred_check_branch
          %207 = sbr.rel (%p205) target = $region28
        $region27: #{tpu_custom_call.1} parent=23 // pred_region
          %s208 = sand.u32 %s34, 1
          %s209 = scalar_lea.sflag [#allocation3], %s208
          %s210 = sand.u32 %s34, 1
          %s211 = smul.addr %s210, 64
          %s212 = scalar_lea.vmem [#allocation2], %s211
          %s213 = smul.u32 4, %s24
          %s215 = ssub.s32 1024, 1024
          %216 = vsyncadd %s209, %s215
          %s217 = smul.addr %s213, 2
          %s218 = smul.addr %s217, 128
          %s219 = scalar_lea.hbm %s0, %s218
          %s220 = sshll.u32 %s212, 4
          %s221 = int_to_ptr.vmem [resolvable:$true] %s220
          %226 = dma.hbm_to_vmem [thread:$0]  %s219, 1024, %s221, %s209, 128, 128, 8
        $region28: #{tpu_custom_call.1} parent=23 // pred_fallthru
          _
        // Predicated region
        $region29: #{tpu_custom_call.1} parent=23 // pred_check
          %p227 = pneg %p70
        $region30: #{tpu_custom_call.1} parent=23 // pred_check_branch
          %229 = sbr.rel (%p227) target = $region32
        $region31: #{tpu_custom_call.1} parent=23 // pred_region
          %s230 = sand.u32 %s24, 1
          %s231 = scalar_lea.sflag [#allocation6], %s230
          %s232 = sand.u32 %s60, 1
          %s233 = smul.addr %s232, 4
          %s234 = scalar_lea.vmem [#allocation5], %s233
          %s235 = smul.u32 4, %s24
          %s237 = ssub.s32 64, 64
          %238 = vsyncadd %s231, %s237
          %s239 = smul.addr %s235, 16
          %s240 = scalar_lea.hbm %s1, %s239
          %s241 = sshll.u32 %s234, 4
          %s242 = int_to_ptr.vmem [resolvable:$true] %s241
          %247 = dma.hbm_to_vmem [thread:$0]  %s240, 64, %s242, %s231, 16, 16, 1
        $region32: #{tpu_custom_call.1} parent=23 // pred_fallthru
          _
      $region24: #{tpu_custom_call.1} parent=5 // pred_fallthru
        _
      %p248 = scmp.le.s32.totalorder 1, %s24
      %p249 = scmp.lt.s32.totalorder %s24, 3
      %p250 = pnand %p248, %p249
      %p251 = pneg %p250
      // Predicated region
      $region33: #{tpu_custom_call.1} parent=5 // pred_check
        _
      $region34: #{tpu_custom_call.1} parent=5 // pred_check_branch
        %253 = sbr.rel (%p250) target = $region36
      $region35: #{tpu_custom_call.1} parent=5 // pred_region
        %s254 = ssub.s32 %s24, 1
        %s255 = sand.u32 %s37, 1
        %s256 = scalar_lea.sflag [#allocation3], %s255
        %s257 = sand.u32 %s37, 1
        %s258 = smul.addr %s257, 64
        %s259 = scalar_lea.vmem [#allocation2], %s258
        // Predicated region
        $region37: #{tpu_custom_call.1} parent=35 // pred_check
          %p260 = pneg %p50
        $region38: #{tpu_custom_call.1} parent=35 // pred_check_branch
          %262 = sbr.rel (%p260) target = $region40
        $region39: #{tpu_custom_call.1} parent=35 // pred_region
          %263 = dma.done %s256, 1024
        $region40: #{tpu_custom_call.1} parent=35 // pred_fallthru
          _
        %s264 = sand.u32 %s29, 1
        %s265 = scalar_lea.sflag [#allocation6], %s264
        %s266 = sand.u32 %s63, 1
        %s267 = smul.addr %s266, 4
        %s268 = scalar_lea.vmem [#allocation5], %s267
        // Predicated region
        $region41: #{tpu_custom_call.1} parent=35 // pred_check
          %p269 = pneg %p76
        $region42: #{tpu_custom_call.1} parent=35 // pred_check_branch
          %271 = sbr.rel (%p269) target = $region44
        $region43: #{tpu_custom_call.1} parent=35 // pred_region
          %272 = dma.done %s265, 64
        $region44: #{tpu_custom_call.1} parent=35 // pred_fallthru
          _
        // Predicated region
        $region45: #{tpu_custom_call.1} parent=35 // pred_check
          %p273 = pneg %p97
        $region46: #{tpu_custom_call.1} parent=35 // pred_check_branch
          %275 = sbr.rel (%p273) target = $region48
        $region47: #{tpu_custom_call.1} parent=35 // pred_region
          %276 = dma.done [#allocation6], 512
        $region48: #{tpu_custom_call.1} parent=35 // pred_fallthru
          _
        %s277 = sand.u32 %s37, 1
        %s278 = scalar_lea.sflag [#allocation3], %s277
        %s279 = sand.u32 %s37, 1
        %s280 = smul.addr %s279, 64
        %s281 = scalar_lea.vmem [#allocation2], %s280
        %p282 = pneg %p50
        %p283 = pneg %p47
        %s284 = sand.u32 %s29, 1
        %s285 = scalar_lea.sflag [#allocation6], %s284
        %s286 = sand.u32 %s63, 1
        %s287 = smul.addr %s286, 4
        %s288 = scalar_lea.vmem [#allocation5], %s287
        %p289 = pneg %p76
        %p290 = pneg %p73
        %p291 = pneg %p97
        %p292 = pneg %p94
        %p293 = pneg %p118
        %p294 = pneg %p115
        %p295 = pneg %p144
        %p296 = pneg %p141
        %s297 = sand.u32 %s131, 1
        %s298 = scalar_lea.sflag [#allocation4], %s297
        %s299 = sand.u32 %s131, 1
        %s300 = smul.addr %s299, 4
        %s301 = scalar_lea.vmem [#allocation8], %s300
        %p302 = pneg %p170
        %p303 = pneg %p167
        %s304 = sand.u32 %s157, 1
        %s305 = scalar_lea.sflag [#allocation10], %s304
        %s306 = sand.u32 %s157, 1
        %s307 = smul.addr %s306, 4
        %s308 = scalar_lea.vmem [#allocation9], %s307
        %s309 = smul.u32 4, %s29
        %s310 = smul.u32 4, %s29
        %s311 = smul.u32 4, %s29
        %s312 = smul.u32 4, %s29
        %v313 = vld [vmem:[%s259] sm:$0xff]
        %v314 = vld [vmem:[%s259 + $0x8] sm:$0xff]
        %v315 = vld [vmem:[%s259 + $0x10] sm:$0xff]
        %v316 = vld [vmem:[%s259 + $0x18] sm:$0xff]
        %v317 = vld [vmem:[%s259 + $0x20] sm:$0xff]
        %v318 = vld [vmem:[%s259 + $0x28] sm:$0xff]
        %v319 = vld [vmem:[%s259 + $0x30] sm:$0xff]
        %v320 = vld [vmem:[%s259 + $0x38] sm:$0xff]
        %v321 = vld [vmem:[#allocation7] sm:$0xff]
        %v322 = vld [vmem:[#allocation7 + $0x8] sm:$0xff]
        %v323 = vld [vmem:[#allocation7 + $0x10] sm:$0xff]
        %v324 = vld [vmem:[#allocation7 + $0x18] sm:$0xff]
        %vm325 = vcmask 261120
        %v327 = vsel %vm325, %v313, 0
        %v330 = vsel %vm325, %v314, 0
        %v333 = vsel %vm325, %v315, 0
        %v336 = vsel %vm325, %v316, 0
        %v339 = vsel %vm325, %v317, 0
        %v342 = vsel %vm325, %v318, 0
        %v345 = vsel %vm325, %v319, 0
        %v348 = vsel %vm325, %v320, 0
        %350 = vmatprep.subr.mxu0 0.0
        %351 = vmatpush1.msra.mxu0 0.0
        %352 = vmatprep.subr.mxu0 0.0
        %353 = vmatpush1.msra.mxu0 0.0
        %354 = vmatprep.subr.mxu0 0.0
        %355 = vmatpush1.msra.mxu0 0.0
        %356 = vmatprep.subr.mxu0 0.0
        %357 = vmatpush1.msra.mxu0 0.0
        %358 = vmatprep.subr.mxu0 0.0
        %359 = vmatpush1.msra.mxu0 0.0
        %360 = vmatprep.subr.mxu0 0.0
        %361 = vmatpush1.msra.mxu0 0.0
        %362 = vmatprep.subr.mxu0 0.0
        %363 = vmatpush1.msra.mxu0 0.0
        %364 = vmatprep.subr.mxu0 0.0
        %365 = vmatpush1.msra.mxu0 0.0
        %366 = vmatprep.subr.mxu0 0.0
        %367 = vmatpush1.msra.mxu0 0.0
        %368 = vmatprep.subr.mxu0 0.0
        %369 = vmatpush1.msra.mxu0 0.0
        %370 = vmatprep.subr.mxu0 0.0
        %371 = vmatpush1.msra.mxu0 0.0
        %372 = vmatprep.subr.mxu0 0.0
        %373 = vmatpush1.msra.mxu0 0.0
        %374 = vmatprep.subr.mxu0 0.0
        %375 = vmatpush1.msra.mxu0 %v324
        %376 = vmatprep.subr.mxu0 0.0
        %377 = vmatpush1.msra.mxu0 %v323
        %378 = vmatprep.subr.mxu0 0.0
        %379 = vmatpush1.msra.mxu0 %v322
        %380 = vmatprep.subr.mxu0 0.0
        %381 = vmatpush1.msra.mxu0 %v321
        %382 = vmatprep.subr.mxu0 0.0
        %383 = vmatpush2.msra.mxu0 0.0
        %384 = vmatprep.subr.mxu0 0.0
        %385 = vmatpush2.msra.mxu0 0.0
        %386 = vmatprep.subr.mxu0 0.0
        %387 = vmatpush2.msra.mxu0 0.0
        %388 = vmatprep.subr.mxu0 0.0
        %389 = vmatpush2.msra.mxu0 0.0
        %390 = vmatprep.subr.mxu0 0.0
        %391 = vmatpush2.msra.mxu0 0.0
        %392 = vmatprep.subr.mxu0 0.0
        %393 = vmatpush2.msra.mxu0 0.0
        %394 = vmatprep.subr.mxu0 0.0
        %395 = vmatpush2.msra.mxu0 0.0
        %396 = vmatprep.subr.mxu0 0.0
        %397 = vmatpush2.msra.mxu0 0.0
        %398 = vmatprep.subr.mxu0 0.0
        %399 = vmatpush2.msra.mxu0 0.0
        %400 = vmatprep.subr.mxu0 0.0
        %401 = vmatpush2.msra.mxu0 0.0
        %402 = vmatprep.subr.mxu0 0.0
        %403 = vmatpush2.msra.mxu0 0.0
        %404 = vmatprep.subr.mxu0 0.0
        %405 = vmatpush2.msra.mxu0 0.0
        %406 = vmatprep.subr.mxu0 0.0
        %407 = vmatpush2.msra.mxu0 0.0
        %408 = vmatprep.subr.mxu0 0.0
        %409 = vmatpush2.msra.mxu0 0.0
        %410 = vmatprep.subr.mxu0 0.0
        %411 = vmatpush2.msra.mxu0 0.0
        %412 = vmatprep.subr.mxu0 0.0
        %413 = vmatpush2.msra.mxu0 0.0
        %414 = vmatprep.mubr.f32.mxu0 0.0
        %415 = vmatmul.mubr.f32.gmra.mxu0 %v327
        %v416 = vpop.f32.mrf.mxu0
        %v417 = vadd.f32 0.0, %v416
        %v418 = vpop.f32.mrf.mxu0
        %419 = vmatprep.mubr.f32.mxu0 0.0
        %420 = vmatmul.mubr.f32.gmra.mxu0 %v330
        %v421 = vpop.f32.mrf.mxu0
        %v422 = vadd.f32 0.0, %v421
        %v423 = vpop.f32.mrf.mxu0
        %424 = vmatprep.mubr.f32.mxu0 0.0
        %425 = vmatmul.mubr.f32.gmra.mxu0 %v333
        %v426 = vpop.f32.mrf.mxu0
        %v427 = vadd.f32 0.0, %v426
        %v428 = vpop.f32.mrf.mxu0
        %429 = vmatprep.mubr.f32.mxu0 0.0
        %430 = vmatmul.mubr.f32.gmra.mxu0 %v336
        %v431 = vpop.f32.mrf.mxu0
        %v432 = vadd.f32 0.0, %v431
        %v433 = vpop.f32.mrf.mxu0
        %434 = vmatprep.mubr.f32.mxu0 0.0
        %435 = vmatmul.mubr.f32.gmra.mxu0 %v339
        %v436 = vpop.f32.mrf.mxu0
        %v437 = vadd.f32 0.0, %v436
        %v438 = vpop.f32.mrf.mxu0
        %439 = vmatprep.mubr.f32.mxu0 0.0
        %440 = vmatmul.mubr.f32.gmra.mxu0 %v342
        %v441 = vpop.f32.mrf.mxu0
        %v442 = vadd.f32 0.0, %v441
        %v443 = vpop.f32.mrf.mxu0
        %444 = vmatprep.mubr.f32.mxu0 0.0
        %445 = vmatmul.mubr.f32.gmra.mxu0 %v345
        %v446 = vpop.f32.mrf.mxu0
        %v447 = vadd.f32 0.0, %v446
        %v448 = vpop.f32.mrf.mxu0
        %449 = vmatprep.mubr.f32.mxu0 0.0
        %450 = vmatmul.mubr.f32.gmra.mxu0 %v348
        %v451 = vpop.f32.mrf.mxu0
        %v452 = vadd.f32 0.0, %v451
        %v453 = vpop.f32.mrf.mxu0
        %454 = vdwg.mxu0
        %v455 = vld [vmem:[%s268] sm:$0x1]
        %v456 = vld [vmem:[%s268 + $0x1] sm:$0x1]
        %v457 = vld [vmem:[%s268 + $0x2] sm:$0x1]
        %v458 = vld [vmem:[%s268 + $0x3] sm:$0x1]
        %v463 = vlaneseq
        %v464 = vshrl.u32 %v463, 7
        %v465 = vsub.s32 0, %v464
        %v466 = vrot.slane %v455, %v465
        %v467 = vlaneseq
        %v468 = vshrl.u32 %v467, 7
        %v469 = vsub.s32 0, %v468
        %v470 = vrot.slane %v456, %v469
        %v471 = vlaneseq
        %v472 = vshrl.u32 %v471, 7
        %v473 = vsub.s32 0, %v472
        %v474 = vrot.slane %v457, %v473
        %v475 = vlaneseq
        %v476 = vshrl.u32 %v475, 7
        %v477 = vsub.s32 0, %v476
        %v478 = vrot.slane %v458, %v477
        %v483 = vadd.f32 %v417, %v466
        %v484 = vadd.f32 %v422, %v466
        %v485 = vadd.f32 %v427, %v470
        %v486 = vadd.f32 %v432, %v470
        %v487 = vadd.f32 %v437, %v474
        %v488 = vadd.f32 %v442, %v474
        %v489 = vadd.f32 %v447, %v478
        %v490 = vadd.f32 %v452, %v478
        %v491 = vmax.f32 %v483, 0.0
        %v492 = vmax.f32 %v484, 0.0
        %v493 = vmax.f32 %v485, 0.0
        %v494 = vmax.f32 %v486, 0.0
        %v495 = vmax.f32 %v487, 0.0
        %v496 = vmax.f32 %v488, 0.0
        %v497 = vmax.f32 %v489, 0.0
        %v498 = vmax.f32 %v490, 0.0
        %v499 = vld [vmem:[%s3] sm:$0x1]
        %v501 = vlaneseq
        %v502 = vshrl.u32 %v501, 7
        %v503 = vsub.s32 0, %v502
        %v504 = vrot.slane %v499, %v503
        %v506 = vmul.f32 %v491, %v504
        %v507 = vmul.f32 %v492, %v504
        %v508 = vmul.f32 %v493, %v504
        %v509 = vmul.f32 %v494, %v504
        %v510 = vmul.f32 %v495, %v504
        %v511 = vmul.f32 %v496, %v504
        %v512 = vmul.f32 %v497, %v504
        %v513 = vmul.f32 %v498, %v504
        %v514 = vsel %vm325, %v506, 0.0
        %515 = vadd.xlane.f32.xlu0 %v514
        %v516 = vpop.xlane.xlu0 %515
        %v517 = vsel %vm325, %v507, 0.0
        %518 = vadd.xlane.f32.xlu0 %v517
        %v519 = vpop.xlane.xlu0 %518
        %v520 = vsel %vm325, %v508, 0.0
        %521 = vadd.xlane.f32.xlu0 %v520
        %v522 = vpop.xlane.xlu0 %521
        %v523 = vsel %vm325, %v509, 0.0
        %524 = vadd.xlane.f32.xlu0 %v523
        %v525 = vpop.xlane.xlu0 %524
        %v526 = vsel %vm325, %v510, 0.0
        %527 = vadd.xlane.f32.xlu0 %v526
        %v528 = vpop.xlane.xlu0 %527
        %v529 = vsel %vm325, %v511, 0.0
        %530 = vadd.xlane.f32.xlu0 %v529
        %v531 = vpop.xlane.xlu0 %530
        %v532 = vsel %vm325, %v512, 0.0
        %533 = vadd.xlane.f32.xlu0 %v532
        %v534 = vpop.xlane.xlu0 %533
        %v535 = vsel %vm325, %v513, 0.0
        %536 = vadd.xlane.f32.xlu0 %v535
        %v537 = vpop.xlane.xlu0 %536
        %v546 = vlaneseq
        %v547 = vand.u32 %v546, 127
        %v548 = vlaneseq
        %v549 = vshrl.u32 %v548, 7
        %v550 = vsub.s32 %v547, %v549
        %v551 = vrot.slane %v516, %v550
        %v552 = vadd.s32 %v547, 4294967288
        %v553 = vlaneseq
        %v554 = vshrl.u32 %v553, 7
        %v555 = vsub.s32 %v552, %v554
        %v556 = vrot.slane %v519, %v555
        %vm557 = vcmask 130112
        %v558 = vsel %vm557, %v556, %v551
        %v559 = vlaneseq
        %v560 = vshrl.u32 %v559, 7
        %v561 = vsub.s32 %v547, %v560
        %v562 = vrot.slane %v522, %v561
        %v563 = vlaneseq
        %v564 = vshrl.u32 %v563, 7
        %v565 = vsub.s32 %v552, %v564
        %v566 = vrot.slane %v525, %v565
        %v567 = vsel %vm557, %v566, %v562
        %v568 = vlaneseq
        %v569 = vshrl.u32 %v568, 7
        %v570 = vsub.s32 %v547, %v569
        %v571 = vrot.slane %v528, %v570
        %v572 = vlaneseq
        %v573 = vshrl.u32 %v572, 7
        %v574 = vsub.s32 %v552, %v573
        %v575 = vrot.slane %v531, %v574
        %v576 = vsel %vm557, %v575, %v571
        %v577 = vlaneseq
        %v578 = vshrl.u32 %v577, 7
        %v579 = vsub.s32 %v547, %v578
        %v580 = vrot.slane %v534, %v579
        %v581 = vlaneseq
        %v582 = vshrl.u32 %v581, 7
        %v583 = vsub.s32 %v552, %v582
        %v584 = vrot.slane %v537, %v583
        %v585 = vsel %vm557, %v584, %v580
        %vm586 = vcmask 1041409
        %v587 = vsel %vm586, %v567, %v558
        %vm588 = vcmask 1042434
        %v589 = vsel %vm588, %v576, %v587
        %vm590 = vcmask 1043459
        %v591 = vsel %vm590, %v585, %v589
        %vm593 = vcmask 125952
        %v594 = vsel %vm593, %v591, -inf
        %595 = vmax.xlane.f32.xlu0 %v594
        %v596 = vpop.xlane.xlu0 %595
        %v598 = vlaneseq
        %v599 = vshrl.u32 %v598, 7
        %v600 = vsub.s32 0, %v599
        %v601 = vrot.slane %v596, %v600
        %v602 = vlaneseq
        %v603 = vshrl.u32 %v602, 7
        %v604 = vsub.s32 1, %v603
        %v605 = vrot.slane %v596, %v604
        %v606 = vlaneseq
        %v607 = vshrl.u32 %v606, 7
        %v608 = vsub.s32 2, %v607
        %v609 = vrot.slane %v596, %v608
        %v610 = vlaneseq
        %v611 = vshrl.u32 %v610, 7
        %v612 = vsub.s32 3, %v611
        %v613 = vrot.slane %v596, %v612
        %v618 = vsub.f32 %v516, %v601
        %v619 = vsub.f32 %v519, %v601
        %v620 = vsub.f32 %v522, %v605
        %v621 = vsub.f32 %v525, %v605
        %v622 = vsub.f32 %v528, %v609
        %v623 = vsub.f32 %v531, %v609
        %v624 = vsub.f32 %v534, %v613
        %v625 = vsub.f32 %v537, %v613
        %v626 = vmul.f32 %v618, 1.442695
        %v627 = vpow.pop %v626
        %v628 = vmul.f32 %v619, 1.442695
        %v629 = vpow.pop %v628
        %v630 = vmul.f32 %v620, 1.442695
        %v631 = vpow.pop %v630
        %v632 = vmul.f32 %v621, 1.442695
        %v633 = vpow.pop %v632
        %v634 = vmul.f32 %v622, 1.442695
        %v635 = vpow.pop %v634
        %v636 = vmul.f32 %v623, 1.442695
        %v637 = vpow.pop %v636
        %v638 = vmul.f32 %v624, 1.442695
        %v639 = vpow.pop %v638
        %v640 = vmul.f32 %v625, 1.442695
        %v641 = vpow.pop %v640
        %650 = vset.pattern.permute.xlu0 0
        %651 = vperm.xlu0 %650, %v627
        %v652 = vpop.permute.xlu0 %651
        %653 = vset.pattern.permute.xlu0 0
        %654 = vperm.xlu0 %653, %v629
        %v655 = vpop.permute.xlu0 %654
        %656 = vset.pattern.permute.xlu0 0
        %657 = vperm.xlu0 %656, %v631
        %v658 = vpop.permute.xlu0 %657
        %659 = vset.pattern.permute.xlu0 0
        %660 = vperm.xlu0 %659, %v633
        %v661 = vpop.permute.xlu0 %660
        %662 = vset.pattern.permute.xlu0 0
        %663 = vperm.xlu0 %662, %v635
        %v664 = vpop.permute.xlu0 %663
        %665 = vset.pattern.permute.xlu0 0
        %666 = vperm.xlu0 %665, %v637
        %v667 = vpop.permute.xlu0 %666
        %668 = vset.pattern.permute.xlu0 0
        %669 = vperm.xlu0 %668, %v639
        %v670 = vpop.permute.xlu0 %669
        %671 = vset.pattern.permute.xlu0 0
        %672 = vperm.xlu0 %671, %v641
        %v673 = vpop.permute.xlu0 %672
        %v674 = vlaneseq
        %v675 = vshrl.u32 %v674, 7
        %v676 = vsub.s32 %v547, %v675
        %v677 = vrot.slane %v652, %v676
        %v678 = vlaneseq
        %v679 = vshrl.u32 %v678, 7
        %v680 = vsub.s32 %v552, %v679
        %v681 = vrot.slane %v655, %v680
        %v682 = vsel %vm557, %v681, %v677
        %v683 = vlaneseq
        %v684 = vshrl.u32 %v683, 7
        %v685 = vsub.s32 %v547, %v684
        %v686 = vrot.slane %v658, %v685
        %v687 = vlaneseq
        %v688 = vshrl.u32 %v687, 7
        %v689 = vsub.s32 %v552, %v688
        %v690 = vrot.slane %v661, %v689
        %v691 = vsel %vm557, %v690, %v686
        %v692 = vlaneseq
        %v693 = vshrl.u32 %v692, 7
        %v694 = vsub.s32 %v547, %v693
        %v695 = vrot.slane %v664, %v694
        %v696 = vlaneseq
        %v697 = vshrl.u32 %v696, 7
        %v698 = vsub.s32 %v552, %v697
        %v699 = vrot.slane %v667, %v698
        %v700 = vsel %vm557, %v699, %v695
        %v701 = vlaneseq
        %v702 = vshrl.u32 %v701, 7
        %v703 = vsub.s32 %v547, %v702
        %v704 = vrot.slane %v670, %v703
        %v705 = vlaneseq
        %v706 = vshrl.u32 %v705, 7
        %v707 = vsub.s32 %v552, %v706
        %v708 = vrot.slane %v673, %v707
        %v709 = vsel %vm557, %v708, %v704
        %v710 = vsel %vm586, %v691, %v682
        %v711 = vsel %vm588, %v700, %v710
        %v712 = vsel %vm590, %v709, %v711
        %v714 = vsel %vm593, %v712, 0.0
        %715 = vadd.xlane.f32.xlu0 %v714
        %v716 = vpop.xlane.xlu0 %715
        %v717 = vrcp.pop %v716
        %v719 = vlaneseq
        %v720 = vshrl.u32 %v719, 7
        %v721 = vsub.s32 0, %v720
        %v722 = vrot.slane %v717, %v721
        %v723 = vlaneseq
        %v724 = vshrl.u32 %v723, 7
        %v725 = vsub.s32 1, %v724
        %v726 = vrot.slane %v717, %v725
        %v727 = vlaneseq
        %v728 = vshrl.u32 %v727, 7
        %v729 = vsub.s32 2, %v728
        %v730 = vrot.slane %v717, %v729
        %v731 = vlaneseq
        %v732 = vshrl.u32 %v731, 7
        %v733 = vsub.s32 3, %v732
        %v734 = vrot.slane %v717, %v733
        %v739 = vmul.f32 %v627, %v722
        %v740 = vmul.f32 %v629, %v722
        %v741 = vmul.f32 %v631, %v726
        %v742 = vmul.f32 %v633, %v726
        %v743 = vmul.f32 %v635, %v730
        %v744 = vmul.f32 %v637, %v730
        %v745 = vmul.f32 %v639, %v734
        %v746 = vmul.f32 %v641, %v734
        %749 = vset.pattern.permute.xlu0 0
        %750 = vperm.xlu0 %749, %v739
        %v751 = vpop.permute.xlu0 %750
        %752 = vset.pattern.permute.xlu0 0
        %753 = vperm.xlu0 %752, %v740
        %v754 = vpop.permute.xlu0 %753
        %v755 = vlaneseq
        %v756 = vshrl.u32 %v755, 7
        %v757 = vsub.s32 %v547, %v756
        %v758 = vrot.slane %v751, %v757
        %v759 = vlaneseq
        %v760 = vshrl.u32 %v759, 7
        %v761 = vsub.s32 %v552, %v760
        %v762 = vrot.slane %v754, %v761
        %v763 = vsel %vm557, %v762, %v758
        %vm764 = vcmask 130048
        %v765 = vsel %vm764, %v763, 0
        %767 = vmatprep.subr.mxu0 0.0
        %768 = vmatpush1.msra.mxu0 0.0
        %769 = vmatprep.subr.mxu0 0.0
        %770 = vmatpush1.msra.mxu0 0.0
        %771 = vmatprep.subr.mxu0 0.0
        %772 = vmatpush1.msra.mxu0 0.0
        %773 = vmatprep.subr.mxu0 0.0
        %774 = vmatpush1.msra.mxu0 0.0
        %775 = vmatprep.subr.mxu0 0.0
        %776 = vmatpush1.msra.mxu0 0.0
        %777 = vmatprep.subr.mxu0 0.0
        %778 = vmatpush1.msra.mxu0 0.0
        %779 = vmatprep.subr.mxu0 0.0
        %780 = vmatpush1.msra.mxu0 0.0
        %781 = vmatprep.subr.mxu0 0.0
        %782 = vmatpush1.msra.mxu0 0.0
        %783 = vmatprep.subr.mxu0 0.0
        %784 = vmatpush1.msra.mxu0 0.0
        %785 = vmatprep.subr.mxu0 0.0
        %786 = vmatpush1.msra.mxu0 0.0
        %787 = vmatprep.subr.mxu0 0.0
        %788 = vmatpush1.msra.mxu0 0.0
        %789 = vmatprep.subr.mxu0 0.0
        %790 = vmatpush1.msra.mxu0 0.0
        %791 = vmatprep.subr.mxu0 0.0
        %792 = vmatpush1.msra.mxu0 0.0
        %793 = vmatprep.subr.mxu0 0.0
        %794 = vmatpush1.msra.mxu0 0.0
        %795 = vmatprep.subr.mxu0 0.0
        %796 = vmatpush1.msra.mxu0 %v314
        %797 = vmatprep.subr.mxu0 0.0
        %798 = vmatpush1.msra.mxu0 %v313
        %799 = vmatprep.subr.mxu0 0.0
        %800 = vmatpush2.msra.mxu0 0.0
        %801 = vmatprep.subr.mxu0 0.0
        %802 = vmatpush2.msra.mxu0 0.0
        %803 = vmatprep.subr.mxu0 0.0
        %804 = vmatpush2.msra.mxu0 0.0
        %805 = vmatprep.subr.mxu0 0.0
        %806 = vmatpush2.msra.mxu0 0.0
        %807 = vmatprep.subr.mxu0 0.0
        %808 = vmatpush2.msra.mxu0 0.0
        %809 = vmatprep.subr.mxu0 0.0
        %810 = vmatpush2.msra.mxu0 0.0
        %811 = vmatprep.subr.mxu0 0.0
        %812 = vmatpush2.msra.mxu0 0.0
        %813 = vmatprep.subr.mxu0 0.0
        %814 = vmatpush2.msra.mxu0 0.0
        %815 = vmatprep.subr.mxu0 0.0
        %816 = vmatpush2.msra.mxu0 0.0
        %817 = vmatprep.subr.mxu0 0.0
        %818 = vmatpush2.msra.mxu0 0.0
        %819 = vmatprep.subr.mxu0 0.0
        %820 = vmatpush2.msra.mxu0 0.0
        %821 = vmatprep.subr.mxu0 0.0
        %822 = vmatpush2.msra.mxu0 0.0
        %823 = vmatprep.subr.mxu0 0.0
        %824 = vmatpush2.msra.mxu0 0.0
        %825 = vmatprep.subr.mxu0 0.0
        %826 = vmatpush2.msra.mxu0 0.0
        %827 = vmatprep.subr.mxu0 0.0
        %828 = vmatpush2.msra.mxu0 0.0
        %829 = vmatprep.subr.mxu0 0.0
        %830 = vmatpush2.msra.mxu0 0.0
        %831 = vmatprep.mubr.f32.mxu0 0.0
        %832 = vmatmul.mubr.f32.gmra.mxu0 %v765
        %v833 = vpop.f32.mrf.mxu0
        %v834 = vadd.f32 0.0, %v833
        %v835 = vpop.f32.mrf.mxu0
        %836 = vdwg.mxu0
        %839 = vset.pattern.permute.xlu0 0
        %840 = vperm.xlu0 %839, %v741
        %v841 = vpop.permute.xlu0 %840
        %842 = vset.pattern.permute.xlu0 0
        %843 = vperm.xlu0 %842, %v742
        %v844 = vpop.permute.xlu0 %843
        %v845 = vlaneseq
        %v846 = vshrl.u32 %v845, 7
        %v847 = vsub.s32 %v547, %v846
        %v848 = vrot.slane %v841, %v847
        %v849 = vlaneseq
        %v850 = vshrl.u32 %v849, 7
        %v851 = vsub.s32 %v552, %v850
        %v852 = vrot.slane %v844, %v851
        %v853 = vsel %vm557, %v852, %v848
        %v854 = vsel %vm764, %v853, 0
        %856 = vmatprep.subr.mxu0 0.0
        %857 = vmatpush1.msra.mxu0 0.0
        %858 = vmatprep.subr.mxu0 0.0
        %859 = vmatpush1.msra.mxu0 0.0
        %860 = vmatprep.subr.mxu0 0.0
        %861 = vmatpush1.msra.mxu0 0.0
        %862 = vmatprep.subr.mxu0 0.0
        %863 = vmatpush1.msra.mxu0 0.0
        %864 = vmatprep.subr.mxu0 0.0
        %865 = vmatpush1.msra.mxu0 0.0
        %866 = vmatprep.subr.mxu0 0.0
        %867 = vmatpush1.msra.mxu0 0.0
        %868 = vmatprep.subr.mxu0 0.0
        %869 = vmatpush1.msra.mxu0 0.0
        %870 = vmatprep.subr.mxu0 0.0
        %871 = vmatpush1.msra.mxu0 0.0
        %872 = vmatprep.subr.mxu0 0.0
        %873 = vmatpush1.msra.mxu0 0.0
        %874 = vmatprep.subr.mxu0 0.0
        %875 = vmatpush1.msra.mxu0 0.0
        %876 = vmatprep.subr.mxu0 0.0
        %877 = vmatpush1.msra.mxu0 0.0
        %878 = vmatprep.subr.mxu0 0.0
        %879 = vmatpush1.msra.mxu0 0.0
        %880 = vmatprep.subr.mxu0 0.0
        %881 = vmatpush1.msra.mxu0 0.0
        %882 = vmatprep.subr.mxu0 0.0
        %883 = vmatpush1.msra.mxu0 0.0
        %884 = vmatprep.subr.mxu0 0.0
        %885 = vmatpush1.msra.mxu0 %v316
        %886 = vmatprep.subr.mxu0 0.0
        %887 = vmatpush1.msra.mxu0 %v315
        %888 = vmatprep.subr.mxu0 0.0
        %889 = vmatpush2.msra.mxu0 0.0
        %890 = vmatprep.subr.mxu0 0.0
        %891 = vmatpush2.msra.mxu0 0.0
        %892 = vmatprep.subr.mxu0 0.0
        %893 = vmatpush2.msra.mxu0 0.0
        %894 = vmatprep.subr.mxu0 0.0
        %895 = vmatpush2.msra.mxu0 0.0
        %896 = vmatprep.subr.mxu0 0.0
        %897 = vmatpush2.msra.mxu0 0.0
        %898 = vmatprep.subr.mxu0 0.0
        %899 = vmatpush2.msra.mxu0 0.0
        %900 = vmatprep.subr.mxu0 0.0
        %901 = vmatpush2.msra.mxu0 0.0
        %902 = vmatprep.subr.mxu0 0.0
        %903 = vmatpush2.msra.mxu0 0.0
        %904 = vmatprep.subr.mxu0 0.0
        %905 = vmatpush2.msra.mxu0 0.0
        %906 = vmatprep.subr.mxu0 0.0
        %907 = vmatpush2.msra.mxu0 0.0
        %908 = vmatprep.subr.mxu0 0.0
        %909 = vmatpush2.msra.mxu0 0.0
        %910 = vmatprep.subr.mxu0 0.0
        %911 = vmatpush2.msra.mxu0 0.0
        %912 = vmatprep.subr.mxu0 0.0
        %913 = vmatpush2.msra.mxu0 0.0
        %914 = vmatprep.subr.mxu0 0.0
        %915 = vmatpush2.msra.mxu0 0.0
        %916 = vmatprep.subr.mxu0 0.0
        %917 = vmatpush2.msra.mxu0 0.0
        %918 = vmatprep.subr.mxu0 0.0
        %919 = vmatpush2.msra.mxu0 0.0
        %920 = vmatprep.mubr.f32.mxu0 0.0
        %921 = vmatmul.mubr.f32.gmra.mxu0 %v854
        %v922 = vpop.f32.mrf.mxu0
        %v923 = vadd.f32 0.0, %v922
        %v924 = vpop.f32.mrf.mxu0
        %925 = vdwg.mxu0
        %928 = vset.pattern.permute.xlu0 0
        %929 = vperm.xlu0 %928, %v743
        %v930 = vpop.permute.xlu0 %929
        %931 = vset.pattern.permute.xlu0 0
        %932 = vperm.xlu0 %931, %v744
        %v933 = vpop.permute.xlu0 %932
        %v934 = vlaneseq
        %v935 = vshrl.u32 %v934, 7
        %v936 = vsub.s32 %v547, %v935
        %v937 = vrot.slane %v930, %v936
        %v938 = vlaneseq
        %v939 = vshrl.u32 %v938, 7
        %v940 = vsub.s32 %v552, %v939
        %v941 = vrot.slane %v933, %v940
        %v942 = vsel %vm557, %v941, %v937
        %v943 = vsel %vm764, %v942, 0
        %945 = vmatprep.subr.mxu0 0.0
        %946 = vmatpush1.msra.mxu0 0.0
        %947 = vmatprep.subr.mxu0 0.0
        %948 = vmatpush1.msra.mxu0 0.0
        %949 = vmatprep.subr.mxu0 0.0
        %950 = vmatpush1.msra.mxu0 0.0
        %951 = vmatprep.subr.mxu0 0.0
        %952 = vmatpush1.msra.mxu0 0.0
        %953 = vmatprep.subr.mxu0 0.0
        %954 = vmatpush1.msra.mxu0 0.0
        %955 = vmatprep.subr.mxu0 0.0
        %956 = vmatpush1.msra.mxu0 0.0
        %957 = vmatprep.subr.mxu0 0.0
        %958 = vmatpush1.msra.mxu0 0.0
        %959 = vmatprep.subr.mxu0 0.0
        %960 = vmatpush1.msra.mxu0 0.0
        %961 = vmatprep.subr.mxu0 0.0
        %962 = vmatpush1.msra.mxu0 0.0
        %963 = vmatprep.subr.mxu0 0.0
        %964 = vmatpush1.msra.mxu0 0.0
        %965 = vmatprep.subr.mxu0 0.0
        %966 = vmatpush1.msra.mxu0 0.0
        %967 = vmatprep.subr.mxu0 0.0
        %968 = vmatpush1.msra.mxu0 0.0
        %969 = vmatprep.subr.mxu0 0.0
        %970 = vmatpush1.msra.mxu0 0.0
        %971 = vmatprep.subr.mxu0 0.0
        %972 = vmatpush1.msra.mxu0 0.0
        %973 = vmatprep.subr.mxu0 0.0
        %974 = vmatpush1.msra.mxu0 %v318
        %975 = vmatprep.subr.mxu0 0.0
        %976 = vmatpush1.msra.mxu0 %v317
        %977 = vmatprep.subr.mxu0 0.0
        %978 = vmatpush2.msra.mxu0 0.0
        %979 = vmatprep.subr.mxu0 0.0
        %980 = vmatpush2.msra.mxu0 0.0
        %981 = vmatprep.subr.mxu0 0.0
        %982 = vmatpush2.msra.mxu0 0.0
        %983 = vmatprep.subr.mxu0 0.0
        %984 = vmatpush2.msra.mxu0 0.0
        %985 = vmatprep.subr.mxu0 0.0
        %986 = vmatpush2.msra.mxu0 0.0
        %987 = vmatprep.subr.mxu0 0.0
        %988 = vmatpush2.msra.mxu0 0.0
        %989 = vmatprep.subr.mxu0 0.0
        %990 = vmatpush2.msra.mxu0 0.0
        %991 = vmatprep.subr.mxu0 0.0
        %992 = vmatpush2.msra.mxu0 0.0
        %993 = vmatprep.subr.mxu0 0.0
        %994 = vmatpush2.msra.mxu0 0.0
        %995 = vmatprep.subr.mxu0 0.0
        %996 = vmatpush2.msra.mxu0 0.0
        %997 = vmatprep.subr.mxu0 0.0
        %998 = vmatpush2.msra.mxu0 0.0
        %999 = vmatprep.subr.mxu0 0.0
        %1000 = vmatpush2.msra.mxu0 0.0
        %1001 = vmatprep.subr.mxu0 0.0
        %1002 = vmatpush2.msra.mxu0 0.0
        %1003 = vmatprep.subr.mxu0 0.0
        %1004 = vmatpush2.msra.mxu0 0.0
        %1005 = vmatprep.subr.mxu0 0.0
        %1006 = vmatpush2.msra.mxu0 0.0
        %1007 = vmatprep.subr.mxu0 0.0
        %1008 = vmatpush2.msra.mxu0 0.0
        %1009 = vmatprep.mubr.f32.mxu0 0.0
        %1010 = vmatmul.mubr.f32.gmra.mxu0 %v943
        %v1011 = vpop.f32.mrf.mxu0
        %v1012 = vadd.f32 0.0, %v1011
        %v1013 = vpop.f32.mrf.mxu0
        %1014 = vdwg.mxu0
        %1017 = vset.pattern.permute.xlu0 0
        %1018 = vperm.xlu0 %1017, %v745
        %v1019 = vpop.permute.xlu0 %1018
        %1020 = vset.pattern.permute.xlu0 0
        %1021 = vperm.xlu0 %1020, %v746
        %v1022 = vpop.permute.xlu0 %1021
        %v1023 = vlaneseq
        %v1024 = vshrl.u32 %v1023, 7
        %v1025 = vsub.s32 %v547, %v1024
        %v1026 = vrot.slane %v1019, %v1025
        %v1027 = vlaneseq
        %v1028 = vshrl.u32 %v1027, 7
        %v1029 = vsub.s32 %v552, %v1028
        %v1030 = vrot.slane %v1022, %v1029
        %v1031 = vsel %vm557, %v1030, %v1026
        %v1032 = vsel %vm764, %v1031, 0
        %1034 = vmatprep.subr.mxu0 0.0
        %1035 = vmatpush1.msra.mxu0 0.0
        %1036 = vmatprep.subr.mxu0 0.0
        %1037 = vmatpush1.msra.mxu0 0.0
        %1038 = vmatprep.subr.mxu0 0.0
        %1039 = vmatpush1.msra.mxu0 0.0
        %1040 = vmatprep.subr.mxu0 0.0
        %1041 = vmatpush1.msra.mxu0 0.0
        %1042 = vmatprep.subr.mxu0 0.0
        %1043 = vmatpush1.msra.mxu0 0.0
        %1044 = vmatprep.subr.mxu0 0.0
        %1045 = vmatpush1.msra.mxu0 0.0
        %1046 = vmatprep.subr.mxu0 0.0
        %1047 = vmatpush1.msra.mxu0 0.0
        %1048 = vmatprep.subr.mxu0 0.0
        %1049 = vmatpush1.msra.mxu0 0.0
        %1050 = vmatprep.subr.mxu0 0.0
        %1051 = vmatpush1.msra.mxu0 0.0
        %1052 = vmatprep.subr.mxu0 0.0
        %1053 = vmatpush1.msra.mxu0 0.0
        %1054 = vmatprep.subr.mxu0 0.0
        %1055 = vmatpush1.msra.mxu0 0.0
        %1056 = vmatprep.subr.mxu0 0.0
        %1057 = vmatpush1.msra.mxu0 0.0
        %1058 = vmatprep.subr.mxu0 0.0
        %1059 = vmatpush1.msra.mxu0 0.0
        %1060 = vmatprep.subr.mxu0 0.0
        %1061 = vmatpush1.msra.mxu0 0.0
        %1062 = vmatprep.subr.mxu0 0.0
        %1063 = vmatpush1.msra.mxu0 %v320
        %1064 = vmatprep.subr.mxu0 0.0
        %1065 = vmatpush1.msra.mxu0 %v319
        %1066 = vmatprep.subr.mxu0 0.0
        %1067 = vmatpush2.msra.mxu0 0.0
        %1068 = vmatprep.subr.mxu0 0.0
        %1069 = vmatpush2.msra.mxu0 0.0
        %1070 = vmatprep.subr.mxu0 0.0
        %1071 = vmatpush2.msra.mxu0 0.0
        %1072 = vmatprep.subr.mxu0 0.0
        %1073 = vmatpush2.msra.mxu0 0.0
        %1074 = vmatprep.subr.mxu0 0.0
        %1075 = vmatpush2.msra.mxu0 0.0
        %1076 = vmatprep.subr.mxu0 0.0
        %1077 = vmatpush2.msra.mxu0 0.0
        %1078 = vmatprep.subr.mxu0 0.0
        %1079 = vmatpush2.msra.mxu0 0.0
        %1080 = vmatprep.subr.mxu0 0.0
        %1081 = vmatpush2.msra.mxu0 0.0
        %1082 = vmatprep.subr.mxu0 0.0
        %1083 = vmatpush2.msra.mxu0 0.0
        %1084 = vmatprep.subr.mxu0 0.0
        %1085 = vmatpush2.msra.mxu0 0.0
        %1086 = vmatprep.subr.mxu0 0.0
        %1087 = vmatpush2.msra.mxu0 0.0
        %1088 = vmatprep.subr.mxu0 0.0
        %1089 = vmatpush2.msra.mxu0 0.0
        %1090 = vmatprep.subr.mxu0 0.0
        %1091 = vmatpush2.msra.mxu0 0.0
        %1092 = vmatprep.subr.mxu0 0.0
        %1093 = vmatpush2.msra.mxu0 0.0
        %1094 = vmatprep.subr.mxu0 0.0
        %1095 = vmatpush2.msra.mxu0 0.0
        %1096 = vmatprep.subr.mxu0 0.0
        %1097 = vmatpush2.msra.mxu0 0.0
        %1098 = vmatprep.mubr.f32.mxu0 0.0
        %1099 = vmatmul.mubr.f32.gmra.mxu0 %v1032
        %v1100 = vpop.f32.mrf.mxu0
        %v1101 = vadd.f32 0.0, %v1100
        %v1102 = vpop.f32.mrf.mxu0
        %1103 = vdwg.mxu0
        %vm1104 = vcmask 253952
        %1105 = vst.msk [vmem:[%s301] sm:$0x1] %vm1104, %v834
        %1106 = vst.msk [vmem:[%s301 + $0x1] sm:$0x1] %vm1104, %v923
        %1107 = vst.msk [vmem:[%s301 + $0x2] sm:$0x1] %vm1104, %v1012
        %1108 = vst.msk [vmem:[%s301 + $0x3] sm:$0x1] %vm1104, %v1101
        %vm1113 = vcmask 122880
        %1114 = vst.msk [vmem:[%s308] sm:$0x1] %vm1113, %v763
        %1115 = vst.msk [vmem:[%s308 + $0x1] sm:$0x1] %vm1113, %v853
        %1116 = vst.msk [vmem:[%s308 + $0x2] sm:$0x1] %vm1113, %v942
        %1117 = vst.msk [vmem:[%s308 + $0x3] sm:$0x1] %vm1113, %v1031
        %s1118 = sand.u32 %s131, 1
        %s1119 = scalar_lea.sflag [#allocation4], %s1118
        %s1120 = sand.u32 %s131, 1
        %s1121 = smul.addr %s1120, 4
        %s1122 = scalar_lea.vmem [#allocation8], %s1121
        %s1123 = sand.u32 %s157, 1
        %s1124 = scalar_lea.sflag [#allocation10], %s1123
        %s1125 = sand.u32 %s157, 1
        %s1126 = smul.addr %s1125, 4
        %s1127 = scalar_lea.vmem [#allocation9], %s1126
        // Predicated region
        $region49: #{tpu_custom_call.1} parent=35 // pred_check
          %p1128 = pneg %p141
        $region50: #{tpu_custom_call.1} parent=35 // pred_check_branch
          %1130 = sbr.rel (%p1128) target = $region52
        $region51: #{tpu_custom_call.1} parent=35 // pred_region
          %s1131 = smul.u32 4, %s29
          %s1133 = ssub.s32 64, 64
          %1134 = vsyncadd %s1119, %s1133
          %s1135 = smul.addr %s1131, 16
          %s1136 = scalar_lea.hbm %s4, %s1135
          %s1137 = sshll.u32 %s1122, 4
          %s1138 = int_to_ptr.vmem [resolvable:$true] %s1137
          %1143 = dma.vmem_to_hbm [thread:$0]  %s1138, 64, %s1136, %s1119, 16, 16, 1
        $region52: #{tpu_custom_call.1} parent=35 // pred_fallthru
          _
        // Predicated region
        $region53: #{tpu_custom_call.1} parent=35 // pred_check
          %p1144 = pneg %p167
        $region54: #{tpu_custom_call.1} parent=35 // pred_check_branch
          %1146 = sbr.rel (%p1144) target = $region56
        $region55: #{tpu_custom_call.1} parent=35 // pred_region
          %s1147 = smul.u32 4, %s29
          %s1149 = ssub.s32 64, 64
          %1150 = vsyncadd %s1124, %s1149
          %s1151 = smul.addr %s1147, 16
          %s1152 = scalar_lea.hbm %s5, %s1151
          %s1153 = sshll.u32 %s1127, 4
          %s1154 = int_to_ptr.vmem [resolvable:$true] %s1153
          %1159 = dma.vmem_to_hbm [thread:$0]  %s1154, 64, %s1152, %s1124, 16, 16, 1
        $region56: #{tpu_custom_call.1} parent=35 // pred_fallthru
          _
      $region36: #{tpu_custom_call.1} parent=5 // pred_fallthru
        _
      %p1160 = scmp.le.s32.totalorder 2, %s24
      // Predicated region
      $region57: #{tpu_custom_call.1} parent=5 // pred_check
        %p1161 = pneg %p1160
      $region58: #{tpu_custom_call.1} parent=5 // pred_check_branch
        %1163 = sbr.rel (%p1161) target = $region60
      $region59: #{tpu_custom_call.1} parent=5 // pred_region
        %s1164 = ssub.s32 %s24, 2
        // Predicated region
        $region61: #{tpu_custom_call.1} parent=59 // pred_check
          %p1165 = pneg %p147
        $region62: #{tpu_custom_call.1} parent=59 // pred_check_branch
          %1167 = sbr.rel (%p1165) target = $region64
        $region63: #{tpu_custom_call.1} parent=59 // pred_region
          %s1168 = sand.u32 %s132, 1
          %s1169 = scalar_lea.sflag [#allocation4], %s1168
          %s1170 = sand.u32 %s132, 1
          %s1171 = smul.addr %s1170, 4
          %s1172 = scalar_lea.vmem [#allocation8], %s1171
          %1173 = dma.done %s1169, 64
        $region64: #{tpu_custom_call.1} parent=59 // pred_fallthru
          _
        // Predicated region
        $region65: #{tpu_custom_call.1} parent=59 // pred_check
          %p1174 = pneg %p173
        $region66: #{tpu_custom_call.1} parent=59 // pred_check_branch
          %1176 = sbr.rel (%p1174) target = $region68
        $region67: #{tpu_custom_call.1} parent=59 // pred_region
          %s1177 = sand.u32 %s158, 1
          %s1178 = scalar_lea.sflag [#allocation10], %s1177
          %s1179 = sand.u32 %s158, 1
          %s1180 = smul.addr %s1179, 4
          %s1181 = scalar_lea.vmem [#allocation9], %s1180
          %1182 = dma.done %s1178, 64
        $region68: #{tpu_custom_call.1} parent=59 // pred_fallthru
          _
      $region60: #{tpu_custom_call.1} parent=5 // pred_fallthru
        _
    $region6: #{tpu_custom_call.1} parent=1 // loop_footer
      %s28 = sadd.s32 1, %s24
    $region7: #{tpu_custom_call.1} parent=1 // loop_footer_branch
      %23 = sbr.rel target = $region3
    $region8: #{tpu_custom_call.1} parent=1 // loop_exit
      _
    %1183 = vsyncpa [#allocation3], 1
    %s1184 = scalar_lea.sflag [#allocation3], 1
    %1185 = vsyncpa %s1184, 1
    %1186 = vsyncpa [#allocation6], 1
    %s1187 = scalar_lea.sflag [#allocation6], 1
    %1188 = vsyncpa %s1187, 1
    %1189 = vsyncpa [#allocation4], 1
    %s1190 = scalar_lea.sflag [#allocation4], 1
    %1191 = vsyncpa %s1190, 1
    %1192 = vsyncpa [#allocation10], 1
    %s1193 = scalar_lea.sflag [#allocation10], 1
    %1194 = vsyncpa %s1193, 1

</llo_original>
